<compile_context>
chip_gen: v7x
topology: tpu7x:2x2x1
jax: 0.10.0
libtpu: 0.0.40
codegen_flags: <defaults>
</compile_context>

<pallas_src>
import functools
import itertools

import jax
import jax.numpy as jnp
import numpy as np
from jax.experimental import pallas as pl
from jax.experimental.pallas import tpu as pltpu


# ----------------------------------------------------------------------------
# Pallas kernel
# ----------------------------------------------------------------------------
def _boson_prob_kernel(a_ref, subset_ref, sign_ref, scale_ref, bias_ref,
                       out_ref, accr_ref, acci_ref, *, n_pad, tb):
    """Per-loop boson-sampling probability, gridded over (loop_block, S_tile).

    a_ref      : (2*N*TB, N) packed re/im rows of identity-padded sub-unitaries
                 for this loop block, row = c*(N*TB) + i*TB + t
    subset_ref : (N, TS)     Ryser subset indicator tile (0/1)
    sign_ref   : (1, TS)     (-1)**|subset| for this tile
    scale_ref  : (TB, 1)     valid * eff_mu
    bias_ref   : (TB, 1)     valid * ((1-eff_mu)*classical + dark)
    out_ref    : (TB, 1)     per-loop probability (written at last S tile)
    accr/acci  : (TB, 128)   lane-dense running signed Ryser partial sums
    """
    N, TB = n_pad, tb
    s = pl.program_id(1)

    @pl.when(s == 0)
    def _():
        accr_ref[...] = jnp.zeros_like(accr_ref)
        acci_ref[...] = jnp.zeros_like(acci_ref)

    subs = subset_ref[...]                      # (N, TS)
    TS = subs.shape[-1]

    # Ryser: perm(A) = (-1)^N * sum_S (-1)^|S| prod_i sum_{j in S} A[i, j]
    # (the global (-1)^N is irrelevant: only |perm|^2 is needed).
    # One MXU pass for all loops in this block, all rows, both re/im planes:
    #   (2*N*TB, N) @ (N, TS) -> row-sums over every column subset of the tile.
    b = jnp.dot(a_ref[...], subs, preferred_element_type=jnp.float32)
    b = b.reshape(2, N, TB, TS)                 # leading-dim split only
    pr, pi = b[0], b[1]                         # (N, TB, TS) real / imag

    # log2(N)-level pairwise tree of complex products over the row axis.
    h = N
    while h > 1:
        h //= 2
        ar, ai = pr[:h], pi[:h]
        br, bi = pr[h:], pi[h:]
        pr = ar * br - ai * bi
        pi = ar * bi + ai * br

    sgn = sign_ref[...]                          # (1, TS)
    cr = pr[0] * sgn                             # (TB, TS) signed contributions
    ci = pi[0] * sgn

    # Lane-dense partial reduction: fold the TS lanes into 128 lanes with
    # static 128-aligned slices (vreg picks, no relayout, no masked stores).
    def lane_fold(x):
        acc = x[:, 0:128]
        for k in range(1, TS // 128):
            acc = acc + x[:, k * 128:(k + 1) * 128]
        return acc

    accr_ref[...] += lane_fold(cr)
    acci_ref[...] += lane_fold(ci)

    @pl.when(s == pl.num_programs(1) - 1)
    def _():
        perm_re = jnp.sum(accr_ref[...], axis=-1, keepdims=True)   # (TB, 1)
        perm_im = jnp.sum(acci_ref[...], axis=-1, keepdims=True)
        perm_abs2 = perm_re * perm_re + perm_im * perm_im          # |perm|^2
        # scale/bias already fold valid-mask, eff_mu, classical term and dark
        # counts (zero-photon / padded loops have scale = bias = 0).
        out_ref[...] = scale_ref[...] * perm_abs2 + bias_ref[...]


def _run_boson_kernel(a_packed, subset, sign, scale, bias, *, n_loops, n_pad,
                      l_pad, tb, batch_size):
    N = n_pad
    L_blocks = l_pad // tb
    S = subset.shape[-1]
    ts = min(S, 2048)                            # subset tile (lane-aligned)

    kernel = functools.partial(_boson_prob_kernel, n_pad=int(N), tb=int(tb))
    probs = pl.pallas_call(
        kernel,
        out_shape=jax.ShapeDtypeStruct((l_pad, 1), jnp.float32),
        grid_spec=pltpu.PrefetchScalarGridSpec(
            num_scalar_prefetch=0,
            grid=(L_blocks, S // ts),
            in_specs=[
                # loop-block LHS: resident across the S axis (one DMA / block)
                pl.BlockSpec((2 * N * tb, N), lambda lb, s: (lb, 0)),
                # subset table / signs stream tile-by-tile along S
                pl.BlockSpec((N, ts), lambda lb, s: (0, s)),
                pl.BlockSpec((1, ts), lambda lb, s: (0, s)),
                pl.BlockSpec((tb, 1), lambda lb, s: (lb, 0)),
                pl.BlockSpec((tb, 1), lambda lb, s: (lb, 0)),
            ],
            out_specs=pl.BlockSpec((tb, 1), lambda lb, s: (lb, 0)),
            scratch_shapes=[pltpu.VMEM((tb, 128), jnp.float32),
                            pltpu.VMEM((tb, 128), jnp.float32)],
        ),
        compiler_params=pltpu.CompilerParams(
            # loop blocks shard across v7x's 2 TensorCores; S is a reduction.
            dimension_semantics=("parallel", "arbitrary")),
    )(a_packed, subset, sign, scale, bias)
    # tiny epilogue: mean over loops + batch broadcast are plain XLA.
    mean = jnp.sum(probs) * (1.0 / n_loops)
    return jnp.broadcast_to(mean, (batch_size,)).astype(jnp.float32)


# ----------------------------------------------------------------------------
# Host-side module (glue: unitary generation + sampling, all deterministic)
# ----------------------------------------------------------------------------
class BosonSamplerPallas:
    def __init__(self, m, num_sources, num_loops, input_loss,
                 coupling_efficiency, detector_inefficiency, multi_photon_prob,
                 mu, temporal_mismatch, spectral_mismatch, arrival_time_jitter,
                 bs_loss, bs_jitter, phase_noise_std, systematic_phase_offset,
                 mode_loss, dark_count_rate, use_advanced_nonlinearity=False,
                 chi=0.0):
        self.m = m
        self.num_sources = num_sources
        self.num_loops = num_loops
        self.input_loss = input_loss
        self.coupling_efficiency = coupling_efficiency
        self.detector_inefficiency = detector_inefficiency
        self.multi_photon_prob = multi_photon_prob
        self.mu = mu
        self.temporal_mismatch = temporal_mismatch
        self.spectral_mismatch = spectral_mismatch
        self.arrival_time_jitter = arrival_time_jitter
        self.bs_loss = bs_loss
        self.bs_jitter = bs_jitter
        self.phase_noise_std = phase_noise_std
        # trainable scalar parameter, deterministically initialized
        self.systematic_phase_offset = jnp.float32(systematic_phase_offset)
        self.mode_loss = mode_loss
        self.dark_count_rate = dark_count_rate
        self.use_advanced_nonlinearity = use_advanced_nonlinearity
        self.chi = chi
        # NOTE: the "advanced" Kerr factor has unit modulus per mode, so
        # |kerr * perm|^2 == |perm|^2 and the same kernel covers both paths.
        need = max(8, 2 * num_sources)              # max photons = 2*num_sources
        self.n_pad = 1 << (need - 1).bit_length()   # power of 2 for the tree
        self.tb = 8                                 # loops per grid block (f32 sublane)
        self.l_pad = ((num_loops + self.tb - 1) // self.tb) * self.tb

    def _effective_mu(self):
        return float(self.mu * (1 - self.temporal_mismatch)
                     * (1 - self.spectral_mismatch)
                     * (1 - self.arrival_time_jitter))

    def _simulate_setup(self, key):
        """Build packed kernel inputs for every simulation loop."""
        m, N, L = self.m, self.n_pad, self.num_loops
        L_pad, TB = self.l_pad, self.tb
        ns = self.num_sources
        p_eff = (self.input_loss * self.coupling_efficiency
                 * self.detector_inefficiency)
        phase_offset = float(self.systematic_phase_offset)

        # ---- batched RNG: 8 device calls total + ONE device->host transfer ----
        k = jax.random.split(key, 8)
        dev = (jax.random.normal(k[0], (L, m, m)),
               jax.random.normal(k[1], (L, m, m)),
               jax.random.normal(k[2], (L, m, m)),            # bs jitter
               jax.random.normal(k[3], (L, m, m)),            # phase noise
               jax.random.uniform(k[4], (L, ns)),             # emit
               jax.random.uniform(k[5], (L, ns)),             # multi-photon
               jax.random.randint(k[6], (L, ns, 2), 0, m),    # input mode picks
               jax.random.randint(k[7], (L, 2 * ns), 0, m))   # output mode picks
        (re, im, jit, ph, emit_u, multi_u, mode_pick, out_pick) = [
            np.asarray(x) for x in jax.device_get(dev)]

        # ---- generate_unitary, stacked over all loops (host glue) ----
        # TODO(synk): QR-based random unitary generation + stochastic photon/mode
        # sampling have no clean Pallas equivalent; they stay on host numpy.
        Q, _ = np.linalg.qr(re + 1j * im)                      # (L, m, m)
        Q = Q * np.sqrt(self.bs_loss) + self.bs_jitter * jit
        if self.phase_noise_std > 0:
            Q = Q * np.exp(1j * self.phase_noise_std * ph)
        if phase_offset != 0:
            Q = Q * np.exp(1j * phase_offset)
        if self.mode_loss is not None:
            Q = Q * np.sqrt(np.asarray(self.mode_loss,
                                       np.float64))[None, :, None]

        # ---- per-loop sampling + sub-matrix extraction (cheap, no device syncs) ----
        a_re = np.zeros((L_pad, N, N), np.float32)
        a_im = np.zeros((L_pad, N, N), np.float32)
        diag = np.arange(N)
        a_re[:, diag, diag] = 1.0        # identity default (perm=1, masked out)
        valid = np.zeros((L_pad, 1), np.float32)
        classical = np.zeros((L_pad, 1), np.float32)
        ref_subs = []                    # unpadded submatrices for the reference

        for l in range(L):
            input_modes = []
            for s in range(ns):
                if emit_u[l, s] < p_eff:
                    n_emit = 2 if multi_u[l, s] < self.multi_photon_prob else 1
                    input_modes.extend(mode_pick[l, s, :n_emit].tolist())
            n = len(input_modes)
            if n == 0:
                ref_subs.append(None)    # zero-photon loop -> probability 0
                continue
            output_modes = out_pick[l, :n].tolist()
            U_sub = Q[l][np.ix_(input_modes, output_modes)]    # (n, n)
            ref_subs.append(np.asarray(U_sub, np.complex128))
            # identity padding preserves the permanent: perm(diag(A, I)) = perm(A)
            a_re[l, :n, :n] = np.real(U_sub).astype(np.float32)
            a_im[l, :n, :n] = np.imag(U_sub).astype(np.float32)
            valid[l, 0] = 1.0
            classical[l, 0] = np.float32(np.prod(np.abs(U_sub) ** 2))

        # ---- per-loop affine fold: prob = scale * |perm|^2 + bias ----
        eff_mu = self._effective_mu()
        dark = self.dark_count_rate * self.m
        scale = (valid * eff_mu).astype(np.float32)
        bias = (valid * ((1.0 - eff_mu) * classical + dark)).astype(np.float32)

        # ---- pack LHS: row = lb*(2*N*TB) + c*(N*TB) + i*TB + t ----
        L_blocks = L_pad // TB
        arr = np.stack([a_re, a_im], axis=0)       # (2, L_pad, N, N)
        arr = arr.transpose(0, 2, 1, 3)            # (2, N, L_pad, N)
        arr = arr.reshape(2, N, L_blocks, TB, N).transpose(2, 0, 1, 3, 4)
        a_packed = np.ascontiguousarray(arr).reshape(
            L_blocks * 2 * N * TB, N).astype(np.float32)

        # ---- vectorized Ryser subset table + signs ----
        S = 1 << N
        col = np.arange(S, dtype=np.int64)
        bits = (col[None, :] >> np.arange(N, dtype=np.int64)[:, None]) & 1
        subset = bits.astype(np.float32)                         # (N, S)
        sign = np.where(bits.sum(axis=0) % 2 == 0, 1.0,
                        -1.0).astype(np.float32)[None, :]        # (1, S)

        arrays = tuple(jnp.asarray(x) for x in
                       (a_packed, subset, sign, scale, bias))
        return arrays, ref_subs

    def forward(self, batch_size, key):
        arrays, _ = self._simulate_setup(key)
        a_packed, subset, sign, scale, bias = arrays
        return _run_boson_kernel(a_packed, subset, sign, scale, bias,
                                 n_loops=self.num_loops, n_pad=self.n_pad,
                                 l_pad=self.l_pad, tb=self.tb,
                                 batch_size=batch_size)

    # ---- pure numpy / brute-force reference (mirrors the torch module) ----
    def reference_forward(self, batch_size, key):
        _, ref_subs = self._simulate_setup(key)
        eff_mu = self._effective_mu()
        dark = self.dark_count_rate * self.m
        probs = []
        for U_sub in ref_subs:
            if U_sub is None:
                probs.append(0.0)
                continue
            perm = _permanent_np(U_sub)
            classical = np.prod(np.abs(U_sub) ** 2)
            p = eff_mu * np.abs(perm) ** 2 + (1 - eff_mu) * classical
            probs.append(p + dark)
        mean = float(np.mean(probs))
        return np.full((batch_size,), mean, np.float32)


def _permanent_np(A):
    n = A.shape[0]
    total = 0.0 + 0.0j
    for sigma in itertools.permutations(range(n)):
        p = 1.0 + 0.0j
        for i in range(n):
            p *= A[i, sigma[i]]
        total += p
    return total


# ----------------------------------------------------------------------------
if __name__ == "__main__":
    m = 8
    num_sources = 3
    num_loops = 4
    sampler = BosonSamplerPallas(
        m=m, num_sources=num_sources, num_loops=num_loops,
        input_loss=0.9, coupling_efficiency=0.9, detector_inefficiency=0.9,
        multi_photon_prob=0.3, mu=0.9, temporal_mismatch=0.05,
        spectral_mismatch=0.05, arrival_time_jitter=0.02,
        bs_loss=0.95, bs_jitter=0.01, phase_noise_std=0.02,
        systematic_phase_offset=0.1, mode_loss=np.full(m, 0.98),
        dark_count_rate=1e-5, use_advanced_nonlinearity=False, chi=0.0)

    key = jax.random.PRNGKey(0)
    batch_size = 2

    out = sampler.forward(batch_size, key)
    out = jax.block_until_ready(out)

    ref = sampler.reference_forward(batch_size, key)
    assert out.shape == (batch_size,)
    np.testing.assert_allclose(np.asarray(out), ref, rtol=2e-2, atol=1e-7)
    print("KERNEL_OK")
</pallas_src>

<mosaic_0001>
module attributes {stable_mosaic.version = 11 : i64} {
  func.func @_boson_prob_kernel(%arg0: i32, %arg1: i32, %arg2: memref<128x8xf32, #tpu.memory_space<vmem>>, %arg3: memref<8x256xf32, #tpu.memory_space<vmem>>, %arg4: memref<1x256xf32, #tpu.memory_space<vmem>>, %arg5: memref<8x1xf32, #tpu.memory_space<vmem>>, %arg6: memref<8x1xf32, #tpu.memory_space<vmem>>, %arg7: memref<8x1xf32, #tpu.memory_space<vmem>>, %arg8: memref<8x128xf32, #tpu.memory_space<vmem>>, %arg9: memref<8x128xf32, #tpu.memory_space<vmem>>) attributes {dimension_semantics = [#tpu.dimension_semantics<parallel>, #tpu.dimension_semantics<arbitrary>], iteration_bounds = array<i64: 1, 1>, scalar_prefetch = 0 : i64, scratch_operands = 2 : i64, tpu.core_type = #tpu.core_type<tc>, window_params = [{transform_indices = @transform_0, window_bounds = array<i64: 128, 8>}, {transform_indices = @transform_1, window_bounds = array<i64: 8, 256>}, {transform_indices = @transform_2, window_bounds = array<i64: 1, 256>}, {transform_indices = @transform_3, window_bounds = array<i64: 8, 1>}, {transform_indices = @transform_4, window_bounds = array<i64: 8, 1>}, {transform_indices = @transform_5, window_bounds = array<i64: 8, 1>}]} {
    %c0_i32 = arith.constant 0 : i32
    %0 = arith.cmpi eq, %arg1, %c0_i32 : i32
    %1 = arith.extui %0 : i1 to i32
    %c0_i32_0 = arith.constant 0 : i32
    %2 = arith.cmpi ne, %1, %c0_i32_0 : i32
    scf.if %2 {
      %cst_16 = arith.constant 0.000000e+00 : f32
      %63 = vector.broadcast %cst_16 : f32 to vector<8x128xf32>
      %c0_17 = arith.constant 0 : index
      %c0_18 = arith.constant 0 : index
      %64 = vector.load %arg8[%c0_17, %c0_18] : memref<8x128xf32, #tpu.memory_space<vmem>>, vector<8x128xf32>
      tpu.vector_store %arg8[%c0_17, %c0_18], %63 {strides = array<i32>} : memref<8x128xf32, #tpu.memory_space<vmem>>, vector<8x128xf32>,
      %cst_19 = arith.constant 0.000000e+00 : f32
      %65 = vector.broadcast %cst_19 : f32 to vector<8x128xf32>
      %c0_20 = arith.constant 0 : index
      %c0_21 = arith.constant 0 : index
      %66 = vector.load %arg9[%c0_20, %c0_21] : memref<8x128xf32, #tpu.memory_space<vmem>>, vector<8x128xf32>
      tpu.vector_store %arg9[%c0_20, %c0_21], %65 {strides = array<i32>} : memref<8x128xf32, #tpu.memory_space<vmem>>, vector<8x128xf32>,
    } else {
    }
    %c0 = arith.constant 0 : index
    %c0_1 = arith.constant 0 : index
    %3 = vector.load %arg3[%c0, %c0_1] : memref<8x256xf32, #tpu.memory_space<vmem>>, vector<8x256xf32>
    %c0_2 = arith.constant 0 : index
    %c0_3 = arith.constant 0 : index
    %4 = vector.load %arg2[%c0_2, %c0_3] : memref<128x8xf32, #tpu.memory_space<vmem>>, vector<128x8xf32>
    %cst = arith.constant dense<0.000000e+00> : vector<128x256xf32>
    %5 = tpu.matmul %4, %3, %cst {dimension_numbers = #tpu.dot_dimension_numbers<[1], [0], [0], [1], [0, 0, 1, 1], [], []>} : vector<128x8xf32>, vector<8x256xf32>, vector<128x256xf32> -> vector<128x256xf32>
    %6 = vector.shape_cast %5 : vector<128x256xf32> to vector<2x8x8x256xf32>
    %7 = vector.extract_strided_slice %6 {offsets = [0, 0, 0, 0], sizes = [1, 8, 8, 256], strides = [1, 1, 1, 1]} : vector<2x8x8x256xf32> to vector<1x8x8x256xf32>
    %8 = vector.shape_cast %7 : vector<1x8x8x256xf32> to vector<8x8x256xf32>
    %9 = vector.extract_strided_slice %6 {offsets = [1, 0, 0, 0], sizes = [1, 8, 8, 256], strides = [1, 1, 1, 1]} : vector<2x8x8x256xf32> to vector<1x8x8x256xf32>
    %10 = vector.shape_cast %9 : vector<1x8x8x256xf32> to vector<8x8x256xf32>
    %11 = vector.extract_strided_slice %8 {offsets = [0, 0, 0], sizes = [4, 8, 256], strides = [1, 1, 1]} : vector<8x8x256xf32> to vector<4x8x256xf32>
    %12 = vector.extract_strided_slice %10 {offsets = [0, 0, 0], sizes = [4, 8, 256], strides = [1, 1, 1]} : vector<8x8x256xf32> to vector<4x8x256xf32>
    %13 = vector.extract_strided_slice %8 {offsets = [4, 0, 0], sizes = [4, 8, 256], strides = [1, 1, 1]} : vector<8x8x256xf32> to vector<4x8x256xf32>
    %14 = vector.extract_strided_slice %10 {offsets = [4, 0, 0], sizes = [4, 8, 256], strides = [1, 1, 1]} : vector<8x8x256xf32> to vector<4x8x256xf32>
    %15 = arith.mulf %11, %13 : vector<4x8x256xf32>
    %16 = arith.mulf %12, %14 : vector<4x8x256xf32>
    %17 = arith.subf %15, %16 : vector<4x8x256xf32>
    %18 = arith.mulf %11, %14 : vector<4x8x256xf32>
    %19 = arith.mulf %12, %13 : vector<4x8x256xf32>
    %20 = arith.addf %18, %19 : vector<4x8x256xf32>
    %21 = vector.extract_strided_slice %17 {offsets = [0, 0, 0], sizes = [2, 8, 256], strides = [1, 1, 1]} : vector<4x8x256xf32> to vector<2x8x256xf32>
    %22 = vector.extract_strided_slice %20 {offsets = [0, 0, 0], sizes = [2, 8, 256], strides = [1, 1, 1]} : vector<4x8x256xf32> to vector<2x8x256xf32>
    %23 = vector.extract_strided_slice %17 {offsets = [2, 0, 0], sizes = [2, 8, 256], strides = [1, 1, 1]} : vector<4x8x256xf32> to vector<2x8x256xf32>
    %24 = vector.extract_strided_slice %20 {offsets = [2, 0, 0], sizes = [2, 8, 256], strides = [1, 1, 1]} : vector<4x8x256xf32> to vector<2x8x256xf32>
    %25 = arith.mulf %21, %23 : vector<2x8x256xf32>
    %26 = arith.mulf %22, %24 : vector<2x8x256xf32>
    %27 = arith.subf %25, %26 : vector<2x8x256xf32>
    %28 = arith.mulf %21, %24 : vector<2x8x256xf32>
    %29 = arith.mulf %22, %23 : vector<2x8x256xf32>
    %30 = arith.addf %28, %29 : vector<2x8x256xf32>
    %31 = vector.extract_strided_slice %27 {offsets = [0, 0, 0], sizes = [1, 8, 256], strides = [1, 1, 1]} : vector<2x8x256xf32> to vector<1x8x256xf32>
    %32 = vector.extract_strided_slice %30 {offsets = [0, 0, 0], sizes = [1, 8, 256], strides = [1, 1, 1]} : vector<2x8x256xf32> to vector<1x8x256xf32>
    %33 = vector.extract_strided_slice %27 {offsets = [1, 0, 0], sizes = [1, 8, 256], strides = [1, 1, 1]} : vector<2x8x256xf32> to vector<1x8x256xf32>
    %34 = vector.extract_strided_slice %30 {offsets = [1, 0, 0], sizes = [1, 8, 256], strides = [1, 1, 1]} : vector<2x8x256xf32> to vector<1x8x256xf32>
    %35 = arith.mulf %31, %33 : vector<1x8x256xf32>
    %36 = arith.mulf %32, %34 : vector<1x8x256xf32>
    %37 = arith.subf %35, %36 : vector<1x8x256xf32>
    %38 = arith.mulf %31, %34 : vector<1x8x256xf32>
    %39 = arith.mulf %32, %33 : vector<1x8x256xf32>
    %40 = arith.addf %38, %39 : vector<1x8x256xf32>
    %c0_4 = arith.constant 0 : index
    %c0_5 = arith.constant 0 : index
    %41 = vector.load %arg4[%c0_4, %c0_5] : memref<1x256xf32, #tpu.memory_space<vmem>>, vector<1x256xf32>
    %42 = vector.shape_cast %37 : vector<1x8x256xf32> to vector<8x256xf32>
    %43 = vector.broadcast %41 : vector<1x256xf32> to vector<8x256xf32>
    %44 = arith.mulf %42, %43 : vector<8x256xf32>
    %45 = vector.shape_cast %40 : vector<1x8x256xf32> to vector<8x256xf32>
    %46 = vector.broadcast %41 : vector<1x256xf32> to vector<8x256xf32>
    %47 = arith.mulf %45, %46 : vector<8x256xf32>
    %c0_6 = arith.constant 0 : index
    %c0_7 = arith.constant 0 : index
    %48 = vector.load %arg8[%c0_6, %c0_7] : memref<8x128xf32, #tpu.memory_space<vmem>>, vector<8x128xf32>
    %49 = vector.extract_strided_slice %44 {offsets = [0, 0], sizes = [8, 128], strides = [1, 1]} : vector<8x256xf32> to vector<8x128xf32>
    %50 = vector.extract_strided_slice %44 {offsets = [0, 128], sizes = [8, 128], strides = [1, 1]} : vector<8x256xf32> to vector<8x128xf32>
    %51 = arith.addf %49, %50 : vector<8x128xf32>
    %52 = arith.addf %48, %51 : vector<8x128xf32>
    %c0_8 = arith.constant 0 : index
    %c0_9 = arith.constant 0 : index
    %53 = vector.load %arg8[%c0_8, %c0_9] : memref<8x128xf32, #tpu.memory_space<vmem>>, vector<8x128xf32>
    tpu.vector_store %arg8[%c0_8, %c0_9], %52 {strides = array<i32>} : memref<8x128xf32, #tpu.memory_space<vmem>>, vector<8x128xf32>,
    %c0_10 = arith.constant 0 : index
    %c0_11 = arith.constant 0 : index
    %54 = vector.load %arg9[%c0_10, %c0_11] : memref<8x128xf32, #tpu.memory_space<vmem>>, vector<8x128xf32>
    %55 = vector.extract_strided_slice %47 {offsets = [0, 0], sizes = [8, 128], strides = [1, 1]} : vector<8x256xf32> to vector<8x128xf32>
    %56 = vector.extract_strided_slice %47 {offsets = [0, 128], sizes = [8, 128], strides = [1, 1]} : vector<8x256xf32> to vector<8x128xf32>
    %57 = arith.addf %55, %56 : vector<8x128xf32>
    %58 = arith.addf %54, %57 : vector<8x128xf32>
    %c0_12 = arith.constant 0 : index
    %c0_13 = arith.constant 0 : index
    %59 = vector.load %arg9[%c0_12, %c0_13] : memref<8x128xf32, #tpu.memory_space<vmem>>, vector<8x128xf32>
    tpu.vector_store %arg9[%c0_12, %c0_13], %58 {strides = array<i32>} : memref<8x128xf32, #tpu.memory_space<vmem>>, vector<8x128xf32>,
    %c0_i32_14 = arith.constant 0 : i32
    %60 = arith.cmpi eq, %arg1, %c0_i32_14 : i32
    %61 = arith.extui %60 : i1 to i32
    %c0_i32_15 = arith.constant 0 : i32
    %62 = arith.cmpi ne, %61, %c0_i32_15 : i32
    scf.if %62 {
      %c0_16 = arith.constant 0 : index
      %c0_17 = arith.constant 0 : index
      %63 = vector.load %arg8[%c0_16, %c0_17] : memref<8x128xf32, #tpu.memory_space<vmem>>, vector<8x128xf32>
      %cst_18 = arith.constant dense<0.000000e+00> : vector<8xf32>
      %64 = vector.multi_reduction <add>, %63, %cst_18 [1] : vector<8x128xf32> to vector<8xf32>
      %65 = vector.shape_cast %64 : vector<8xf32> to vector<8x1xf32>
      %c0_19 = arith.constant 0 : index
      %c0_20 = arith.constant 0 : index
      %66 = vector.load %arg9[%c0_19, %c0_20] : memref<8x128xf32, #tpu.memory_space<vmem>>, vector<8x128xf32>
      %cst_21 = arith.constant dense<0.000000e+00> : vector<8xf32>
      %67 = vector.multi_reduction <add>, %66, %cst_21 [1] : vector<8x128xf32> to vector<8xf32>
      %68 = vector.shape_cast %67 : vector<8xf32> to vector<8x1xf32>
      %69 = arith.mulf %65, %65 : vector<8x1xf32>
      %70 = arith.mulf %68, %68 : vector<8x1xf32>
      %71 = arith.addf %69, %70 : vector<8x1xf32>
      %c0_22 = arith.constant 0 : index
      %c0_23 = arith.constant 0 : index
      %72 = vector.load %arg5[%c0_22, %c0_23] : memref<8x1xf32, #tpu.memory_space<vmem>>, vector<8x1xf32>
      %73 = arith.mulf %72, %71 : vector<8x1xf32>
      %c0_24 = arith.constant 0 : index
      %c0_25 = arith.constant 0 : index
      %74 = vector.load %arg6[%c0_24, %c0_25] : memref<8x1xf32, #tpu.memory_space<vmem>>, vector<8x1xf32>
      %75 = arith.addf %73, %74 : vector<8x1xf32>
      %c0_26 = arith.constant 0 : index
      %c0_27 = arith.constant 0 : index
      %76 = vector.load %arg7[%c0_26, %c0_27] : memref<8x1xf32, #tpu.memory_space<vmem>>, vector<8x1xf32>
      tpu.vector_store %arg7[%c0_26, %c0_27], %75 {strides = array<i32>} : memref<8x1xf32, #tpu.memory_space<vmem>>, vector<8x1xf32>,
    } else {
    }
    return
  }
  func.func @transform_0(%arg0: i32, %arg1: i32) -> (i32, i32) {
    %c0_i32 = arith.constant 0 : i32
    %c0_i32_0 = arith.constant 0 : i32
    return %arg0, %c0_i32 : i32, i32
  }
  func.func @transform_1(%arg0: i32, %arg1: i32) -> (i32, i32) {
    %c0_i32 = arith.constant 0 : i32
    %c0_i32_0 = arith.constant 0 : i32
    return %c0_i32, %arg1 : i32, i32
  }
  func.func @transform_2(%arg0: i32, %arg1: i32) -> (i32, i32) {
    %c0_i32 = arith.constant 0 : i32
    %c0_i32_0 = arith.constant 0 : i32
    return %c0_i32, %arg1 : i32, i32
  }
  func.func @transform_3(%arg0: i32, %arg1: i32) -> (i32, i32) {
    %c0_i32 = arith.constant 0 : i32
    %c0_i32_0 = arith.constant 0 : i32
    return %arg0, %c0_i32 : i32, i32
  }
  func.func @transform_4(%arg0: i32, %arg1: i32) -> (i32, i32) {
    %c0_i32 = arith.constant 0 : i32
    %c0_i32_0 = arith.constant 0 : i32
    return %arg0, %c0_i32 : i32, i32
  }
  func.func @transform_5(%arg0: i32, %arg1: i32) -> (i32, i32) {
    %c0_i32 = arith.constant 0 : i32
    %c0_i32_0 = arith.constant 0 : i32
    return %arg0, %c0_i32 : i32, i32
  }
}

</mosaic_0001>

<llo_original>
// kernel: tpu_custom_call.1
$region0: #{tpu_custom_call.1}
  #allocation0 [shape = 'u32[]', space=smem, size = 0x4, offset = 0x4, fixed_abs, tag = 'smem constant byte address 0x4 - core index']
  #allocation1 [shape = 'u32[144,128]{1,0:T(1,128)}', space=vmem, size = 0x12000, scoped, tag = 'internal scratch']
  #allocation2 [shape = 'f32[8,128]{1,0:T(8,128)}', space=vmem, size = 0x1000, scoped, tag = 'scratch operand']
  #allocation3 [shape = 'f32[8,128]{1,0:T(8,128)}', space=vmem, size = 0x1000, scoped, tag = 'scratch operand']
  %s0 = inlined_call_operand.vmem [shape: f32[128,8], index: 0, kind: input, shape index: {}]
  %s1 = inlined_call_operand.vmem [shape: f32[8,256], index: 1, kind: input, shape index: {}]
  %s2 = inlined_call_operand.vmem [shape: f32[1,256], index: 2, kind: input, shape index: {}]
  %s3 = inlined_call_operand.vmem [shape: f32[8,1], index: 3, kind: input, shape index: {}]
  %s4 = inlined_call_operand.vmem [shape: f32[8,1], index: 4, kind: input, shape index: {}]
  %s5 = inlined_call_operand.vmem [shape: f32[8,1], index: 5, kind: output, shape index: {}]
  %s6 = sld [smem:[#allocation0]]
  $region38: #{tpu_custom_call.1} parent=0
    _
  %s8 = ssub.s32 1, %s6
  %s9 = scalar_select 0, %s8, %s6
  // Predicated region
  $region2: #{tpu_custom_call.1} parent=0 // pred_check
    _
  $region3: #{tpu_custom_call.1} parent=0 // pred_check_branch
    %11 = sbr.rel (0) target = $region5
  $region4: #{tpu_custom_call.1} parent=0 // pred_region
    _
  $region5: #{tpu_custom_call.1} parent=0 // pred_fallthru
    _
  // Predicated region
  $region6: #{tpu_custom_call.1} parent=0 // pred_check
    _
  $region7: #{tpu_custom_call.1} parent=0 // pred_check_branch
    %13 = sbr.rel (0) target = $region9
  $region8: #{tpu_custom_call.1} parent=0 // pred_region
    _
  $region9: #{tpu_custom_call.1} parent=0 // pred_fallthru
    _
  // Predicated region
  $region10: #{tpu_custom_call.1} parent=0 // pred_check
    _
  $region11: #{tpu_custom_call.1} parent=0 // pred_check_branch
    %15 = sbr.rel (0) target = $region13
  $region12: #{tpu_custom_call.1} parent=0 // pred_region
    _
  $region13: #{tpu_custom_call.1} parent=0 // pred_fallthru
    _
  // Predicated region
  $region14: #{tpu_custom_call.1} parent=0 // pred_check
    _
  $region15: #{tpu_custom_call.1} parent=0 // pred_check_branch
    %17 = sbr.rel (0) target = $region17
  $region16: #{tpu_custom_call.1} parent=0 // pred_region
    _
  $region17: #{tpu_custom_call.1} parent=0 // pred_fallthru
    _
  // Predicated region
  $region18: #{tpu_custom_call.1} parent=0 // pred_check
    _
  $region19: #{tpu_custom_call.1} parent=0 // pred_check_branch
    %19 = sbr.rel (0) target = $region21
  $region20: #{tpu_custom_call.1} parent=0 // pred_region
    _
  $region21: #{tpu_custom_call.1} parent=0 // pred_fallthru
    _
  %p20 = scmp.eq.s32.totalorder 0, 0
  // Predicated region
  $region22: #{tpu_custom_call.1} parent=0 // pred_check
    %p21 = pneg %p20
  $region23: #{tpu_custom_call.1} parent=0 // pred_check_branch
    %23 = sbr.rel (%p21) target = $region25
  $region24: #{tpu_custom_call.1} parent=0 // pred_region
    %24 = vst [vmem:[#allocation2] sm:$0xff] 0.0
    %25 = vst [vmem:[#allocation3] sm:$0xff] 0.0
  $region25: #{tpu_custom_call.1} parent=0 // pred_fallthru
    _
  %v26 = vld [vmem:[%s1] sm:$0xff]
  %v27 = vld [vmem:[%s1 + $0x8] sm:$0xff]
  %v28 = vld [vmem:[%s0] sm:$0xff]
  %v29 = vld [vmem:[%s0 + $0x8] sm:$0xff]
  %v30 = vld [vmem:[%s0 + $0x10] sm:$0xff]
  %v31 = vld [vmem:[%s0 + $0x18] sm:$0xff]
  %v32 = vld [vmem:[%s0 + $0x20] sm:$0xff]
  %v33 = vld [vmem:[%s0 + $0x28] sm:$0xff]
  %v34 = vld [vmem:[%s0 + $0x30] sm:$0xff]
  %v35 = vld [vmem:[%s0 + $0x38] sm:$0xff]
  %v36 = vld [vmem:[%s0 + $0x40] sm:$0xff]
  %v37 = vld [vmem:[%s0 + $0x48] sm:$0xff]
  %v38 = vld [vmem:[%s0 + $0x50] sm:$0xff]
  %v39 = vld [vmem:[%s0 + $0x58] sm:$0xff]
  %v40 = vld [vmem:[%s0 + $0x60] sm:$0xff]
  %v41 = vld [vmem:[%s0 + $0x68] sm:$0xff]
  %v42 = vld [vmem:[%s0 + $0x70] sm:$0xff]
  %v43 = vld [vmem:[%s0 + $0x78] sm:$0xff]
  %vm44 = vcmask 64512
  %v46 = vsel %vm44, %v28, 0
  %v49 = vsel %vm44, %v29, 0
  %v52 = vsel %vm44, %v30, 0
  %v55 = vsel %vm44, %v31, 0
  %v58 = vsel %vm44, %v32, 0
  %v61 = vsel %vm44, %v33, 0
  %v64 = vsel %vm44, %v34, 0
  %v67 = vsel %vm44, %v35, 0
  %v70 = vsel %vm44, %v36, 0
  %v73 = vsel %vm44, %v37, 0
  %v76 = vsel %vm44, %v38, 0
  %v79 = vsel %vm44, %v39, 0
  %v82 = vsel %vm44, %v40, 0
  %v85 = vsel %vm44, %v41, 0
  %v88 = vsel %vm44, %v42, 0
  %v91 = vsel %vm44, %v43, 0
  %93 = vmatprep.subr.mxu0 %v27
  %94 = vmatpush1.msra.mxu0 %v26
  %95 = vmatprep.subr.mxu0 0.0
  %96 = vmatpush1.msra.mxu0 0.0
  %97 = vmatprep.subr.mxu0 0.0
  %98 = vmatpush1.msra.mxu0 0.0
  %99 = vmatprep.subr.mxu0 0.0
  %100 = vmatpush1.msra.mxu0 0.0
  %101 = vmatprep.subr.mxu0 0.0
  %102 = vmatpush1.msra.mxu0 0.0
  %103 = vmatprep.subr.mxu0 0.0
  %104 = vmatpush1.msra.mxu0 0.0
  %105 = vmatprep.subr.mxu0 0.0
  %106 = vmatpush1.msra.mxu0 0.0
  %107 = vmatprep.subr.mxu0 0.0
  %108 = vmatpush1.msra.mxu0 0.0
  %109 = vmatprep.subr.mxu0 0.0
  %110 = vmatpush1.msra.mxu0 0.0
  %111 = vmatprep.subr.mxu0 0.0
  %112 = vmatpush1.msra.mxu0 0.0
  %113 = vmatprep.subr.mxu0 0.0
  %114 = vmatpush1.msra.mxu0 0.0
  %115 = vmatprep.subr.mxu0 0.0
  %116 = vmatpush1.msra.mxu0 0.0
  %117 = vmatprep.subr.mxu0 0.0
  %118 = vmatpush1.msra.mxu0 0.0
  %119 = vmatprep.subr.mxu0 0.0
  %120 = vmatpush1.msra.mxu0 0.0
  %121 = vmatprep.subr.mxu0 0.0
  %122 = vmatpush1.msra.mxu0 0.0
  %123 = vmatprep.subr.mxu0 0.0
  %124 = vmatpush1.msra.mxu0 0.0
  %125 = vmatprep.subr.mxu0 0.0
  %126 = vmatpush1.msra.mxu0 0.0
  %127 = vmatprep.subr.mxu0 0.0
  %128 = vmatpush1.msra.mxu0 0.0
  %129 = vmatprep.subr.mxu0 0.0
  %130 = vmatpush1.msra.mxu0 0.0
  %131 = vmatprep.subr.mxu0 0.0
  %132 = vmatpush1.msra.mxu0 0.0
  %133 = vmatprep.subr.mxu0 0.0
  %134 = vmatpush1.msra.mxu0 0.0
  %135 = vmatprep.subr.mxu0 0.0
  %136 = vmatpush1.msra.mxu0 0.0
  %137 = vmatprep.subr.mxu0 0.0
  %138 = vmatpush1.msra.mxu0 0.0
  %139 = vmatprep.subr.mxu0 0.0
  %140 = vmatpush1.msra.mxu0 0.0
  %141 = vmatprep.subr.mxu0 0.0
  %142 = vmatpush1.msra.mxu0 0.0
  %143 = vmatprep.subr.mxu0 0.0
  %144 = vmatpush1.msra.mxu0 0.0
  %145 = vmatprep.subr.mxu0 0.0
  %146 = vmatpush1.msra.mxu0 0.0
  %147 = vmatprep.subr.mxu0 0.0
  %148 = vmatpush1.msra.mxu0 0.0
  %149 = vmatprep.subr.mxu0 0.0
  %150 = vmatpush1.msra.mxu0 0.0
  %151 = vmatprep.subr.mxu0 0.0
  %152 = vmatpush1.msra.mxu0 0.0
  %153 = vmatprep.subr.mxu0 0.0
  %154 = vmatpush1.msra.mxu0 0.0
  %155 = vmatprep.subr.mxu0 0.0
  %156 = vmatpush1.msra.mxu0 0.0
  %157 = vmatprep.mubr.f32.mxu0 0.0
  %158 = vmatmul.mubr.f32.gmra.mrb[0].mxu0 %v46
  %v159 = vpop.f32.mrb[0].mxu0
  %v160 = vadd.f32 0.0, %v159
  %v161 = vpop.f32.mrb[0].mxu0
  %v162 = vadd.f32 0.0, %v161
  %163 = vmatprep.mubr.f32.mxu0 0.0
  %164 = vmatmul.mubr.f32.gmra.mrb[0].mxu0 %v49
  %v165 = vpop.f32.mrb[0].mxu0
  %v166 = vadd.f32 0.0, %v165
  %v167 = vpop.f32.mrb[0].mxu0
  %v168 = vadd.f32 0.0, %v167
  %169 = vmatprep.mubr.f32.mxu0 0.0
  %170 = vmatmul.mubr.f32.gmra.mrb[0].mxu0 %v52
  %v171 = vpop.f32.mrb[0].mxu0
  %v172 = vadd.f32 0.0, %v171
  %v173 = vpop.f32.mrb[0].mxu0
  %v174 = vadd.f32 0.0, %v173
  %175 = vmatprep.mubr.f32.mxu0 0.0
  %176 = vmatmul.mubr.f32.gmra.mrb[0].mxu0 %v55
  %v177 = vpop.f32.mrb[0].mxu0
  %v178 = vadd.f32 0.0, %v177
  %v179 = vpop.f32.mrb[0].mxu0
  %v180 = vadd.f32 0.0, %v179
  %181 = vmatprep.mubr.f32.mxu0 0.0
  %182 = vmatmul.mubr.f32.gmra.mrb[0].mxu0 %v58
  %v183 = vpop.f32.mrb[0].mxu0
  %v184 = vadd.f32 0.0, %v183
  %v185 = vpop.f32.mrb[0].mxu0
  %v186 = vadd.f32 0.0, %v185
  %187 = vmatprep.mubr.f32.mxu0 0.0
  %188 = vmatmul.mubr.f32.gmra.mrb[0].mxu0 %v61
  %v189 = vpop.f32.mrb[0].mxu0
  %v190 = vadd.f32 0.0, %v189
  %v191 = vpop.f32.mrb[0].mxu0
  %v192 = vadd.f32 0.0, %v191
  %193 = vmatprep.mubr.f32.mxu0 0.0
  %194 = vmatmul.mubr.f32.gmra.mrb[0].mxu0 %v64
  %v195 = vpop.f32.mrb[0].mxu0
  %v196 = vadd.f32 0.0, %v195
  %v197 = vpop.f32.mrb[0].mxu0
  %v198 = vadd.f32 0.0, %v197
  %199 = vmatprep.mubr.f32.mxu0 0.0
  %200 = vmatmul.mubr.f32.gmra.mrb[0].mxu0 %v67
  %v201 = vpop.f32.mrb[0].mxu0
  %v202 = vadd.f32 0.0, %v201
  %v203 = vpop.f32.mrb[0].mxu0
  %v204 = vadd.f32 0.0, %v203
  %205 = vmatprep.mubr.f32.mxu0 0.0
  %206 = vmatmul.mubr.f32.gmra.mrb[0].mxu0 %v70
  %v207 = vpop.f32.mrb[0].mxu0
  %v208 = vadd.f32 0.0, %v207
  %v209 = vpop.f32.mrb[0].mxu0
  %v210 = vadd.f32 0.0, %v209
  %211 = vmatprep.mubr.f32.mxu0 0.0
  %212 = vmatmul.mubr.f32.gmra.mrb[0].mxu0 %v73
  %v213 = vpop.f32.mrb[0].mxu0
  %v214 = vadd.f32 0.0, %v213
  %v215 = vpop.f32.mrb[0].mxu0
  %v216 = vadd.f32 0.0, %v215
  %217 = vmatprep.mubr.f32.mxu0 0.0
  %218 = vmatmul.mubr.f32.gmra.mrb[0].mxu0 %v76
  %v219 = vpop.f32.mrb[0].mxu0
  %v220 = vadd.f32 0.0, %v219
  %v221 = vpop.f32.mrb[0].mxu0
  %v222 = vadd.f32 0.0, %v221
  %223 = vmatprep.mubr.f32.mxu0 0.0
  %224 = vmatmul.mubr.f32.gmra.mrb[0].mxu0 %v79
  %v225 = vpop.f32.mrb[0].mxu0
  %v226 = vadd.f32 0.0, %v225
  %v227 = vpop.f32.mrb[0].mxu0
  %v228 = vadd.f32 0.0, %v227
  %229 = vmatprep.mubr.f32.mxu0 0.0
  %230 = vmatmul.mubr.f32.gmra.mrb[0].mxu0 %v82
  %v231 = vpop.f32.mrb[0].mxu0
  %v232 = vadd.f32 0.0, %v231
  %v233 = vpop.f32.mrb[0].mxu0
  %v234 = vadd.f32 0.0, %v233
  %235 = vmatprep.mubr.f32.mxu0 0.0
  %236 = vmatmul.mubr.f32.gmra.mrb[0].mxu0 %v85
  %v237 = vpop.f32.mrb[0].mxu0
  %v238 = vadd.f32 0.0, %v237
  %v239 = vpop.f32.mrb[0].mxu0
  %v240 = vadd.f32 0.0, %v239
  %241 = vmatprep.mubr.f32.mxu0 0.0
  %242 = vmatmul.mubr.f32.gmra.mrb[0].mxu0 %v88
  %v243 = vpop.f32.mrb[0].mxu0
  %v244 = vadd.f32 0.0, %v243
  %v245 = vpop.f32.mrb[0].mxu0
  %v246 = vadd.f32 0.0, %v245
  %247 = vmatprep.mubr.f32.mxu0 0.0
  %248 = vmatmul.mubr.f32.gmra.mrb[0].mxu0 %v91
  %v249 = vpop.f32.mrb[0].mxu0
  %v250 = vadd.f32 0.0, %v249
  %v251 = vpop.f32.mrb[0].mxu0
  %v252 = vadd.f32 0.0, %v251
  %253 = vdwg.mxu0
  %v254 = vmul.f32 %v160, %v184
  %v255 = vmul.f32 %v162, %v186
  %v256 = vmul.f32 %v166, %v190
  %v257 = vmul.f32 %v168, %v192
  %v258 = vmul.f32 %v172, %v196
  %v259 = vmul.f32 %v174, %v198
  %v260 = vmul.f32 %v178, %v202
  %v261 = vmul.f32 %v180, %v204
  %v262 = vmul.f32 %v208, %v232
  %v263 = vmul.f32 %v210, %v234
  %v264 = vmul.f32 %v214, %v238
  %v265 = vmul.f32 %v216, %v240
  %v266 = vmul.f32 %v220, %v244
  %v267 = vmul.f32 %v222, %v246
  %v268 = vmul.f32 %v226, %v250
  %v269 = vmul.f32 %v228, %v252
  %v270 = vsub.f32 %v254, %v262
  %v271 = vsub.f32 %v255, %v263
  %v272 = vsub.f32 %v256, %v264
  %v273 = vsub.f32 %v257, %v265
  %v274 = vsub.f32 %v258, %v266
  %v275 = vsub.f32 %v259, %v267
  %v276 = vsub.f32 %v260, %v268
  %v277 = vsub.f32 %v261, %v269
  %v278 = vmul.f32 %v160, %v232
  %v279 = vmul.f32 %v162, %v234
  %v280 = vmul.f32 %v166, %v238
  %v281 = vmul.f32 %v168, %v240
  %v282 = vmul.f32 %v172, %v244
  %v283 = vmul.f32 %v174, %v246
  %v284 = vmul.f32 %v178, %v250
  %v285 = vmul.f32 %v180, %v252
  %v286 = vmul.f32 %v208, %v184
  %v287 = vmul.f32 %v210, %v186
  %v288 = vmul.f32 %v214, %v190
  %v289 = vmul.f32 %v216, %v192
  %v290 = vmul.f32 %v220, %v196
  %v291 = vmul.f32 %v222, %v198
  %v292 = vmul.f32 %v226, %v202
  %v293 = vmul.f32 %v228, %v204
  %v294 = vadd.f32 %v278, %v286
  %v295 = vadd.f32 %v279, %v287
  %v296 = vadd.f32 %v280, %v288
  %v297 = vadd.f32 %v281, %v289
  %v298 = vadd.f32 %v282, %v290
  %v299 = vadd.f32 %v283, %v291
  %v300 = vadd.f32 %v284, %v292
  %v301 = vadd.f32 %v285, %v293
  %v302 = vmul.f32 %v270, %v274
  %v303 = vmul.f32 %v271, %v275
  %v304 = vmul.f32 %v272, %v276
  %v305 = vmul.f32 %v273, %v277
  %v306 = vmul.f32 %v294, %v298
  %v307 = vmul.f32 %v295, %v299
  %v308 = vmul.f32 %v296, %v300
  %v309 = vmul.f32 %v297, %v301
  %v310 = vsub.f32 %v302, %v306
  %v311 = vsub.f32 %v303, %v307
  %v312 = vsub.f32 %v304, %v308
  %v313 = vsub.f32 %v305, %v309
  %v314 = vmul.f32 %v270, %v298
  %v315 = vmul.f32 %v271, %v299
  %v316 = vmul.f32 %v272, %v300
  %v317 = vmul.f32 %v273, %v301
  %v318 = vmul.f32 %v294, %v274
  %v319 = vmul.f32 %v295, %v275
  %v320 = vmul.f32 %v296, %v276
  %v321 = vmul.f32 %v297, %v277
  %v322 = vadd.f32 %v314, %v318
  %v323 = vadd.f32 %v315, %v319
  %v324 = vadd.f32 %v316, %v320
  %v325 = vadd.f32 %v317, %v321
  %v326 = vmul.f32 %v310, %v312
  %v327 = vmul.f32 %v311, %v313
  %v328 = vmul.f32 %v322, %v324
  %v329 = vmul.f32 %v323, %v325
  %v330 = vsub.f32 %v326, %v328
  %v331 = vsub.f32 %v327, %v329
  %v332 = vmul.f32 %v310, %v324
  %v333 = vmul.f32 %v311, %v325
  %v334 = vmul.f32 %v322, %v312
  %v335 = vmul.f32 %v323, %v313
  %v336 = vadd.f32 %v332, %v334
  %v337 = vadd.f32 %v333, %v335
  %v338 = vld [vmem:[%s2] sm:$0x3]
  %v340 = vlaneseq
  %v341 = vshrl.u32 %v340, 7
  %v342 = vsub.s32 0, %v341
  %v343 = vrot.slane %v338, %v342
  %v344 = vlaneseq
  %v345 = vshrl.u32 %v344, 7
  %v346 = vsub.s32 1, %v345
  %v347 = vrot.slane %v338, %v346
  %v350 = vmul.f32 %v330, %v343
  %v351 = vmul.f32 %v331, %v347
  %v352 = vmul.f32 %v336, %v343
  %v353 = vmul.f32 %v337, %v347
  %v354 = vld [vmem:[#allocation2] sm:$0xff]
  %v355 = vadd.f32 %v350, %v351
  %v356 = vadd.f32 %v354, %v355
  %357 = vst [vmem:[#allocation2] sm:$0xff] %v356
  %v358 = vld [vmem:[#allocation3] sm:$0xff]
  %v359 = vadd.f32 %v352, %v353
  %v360 = vadd.f32 %v358, %v359
  %361 = vst [vmem:[#allocation3] sm:$0xff] %v360
  // Predicated region
  $region26: #{tpu_custom_call.1} parent=0 // pred_check
    %p362 = pneg %p20
  $region27: #{tpu_custom_call.1} parent=0 // pred_check_branch
    %364 = sbr.rel (%p362) target = $region29
  $region28: #{tpu_custom_call.1} parent=0 // pred_region
    %v365 = vld [vmem:[#allocation2] sm:$0xff]
    %366 = vadd.xlane.f32.xlu0 %v365
    %v367 = vpop.xlane.xlu0 %366
    %v368 = vld [vmem:[#allocation3] sm:$0xff]
    %369 = vadd.xlane.f32.xlu0 %v368
    %v370 = vpop.xlane.xlu0 %369
    %v371 = vmul.f32 %v367, %v367
    %v372 = vmul.f32 %v370, %v370
    %v373 = vadd.f32 %v371, %v372
    %v374 = vld [vmem:[%s3] sm:$0xff]
    %v375 = vmul.f32 %v374, %v373
    %v376 = vld [vmem:[%s4] sm:$0xff]
    %v377 = vadd.f32 %v375, %v376
    %vm378 = vcmask 7168
    %379 = vst.msk [vmem:[%s5] sm:$0xff] %vm378, %v377
  $region29: #{tpu_custom_call.1} parent=0 // pred_fallthru
    _
  // Predicated region
  $region30: #{tpu_custom_call.1} parent=0 // pred_check
    _
  $region31: #{tpu_custom_call.1} parent=0 // pred_check_branch
    %381 = sbr.rel (0) target = $region33
  $region32: #{tpu_custom_call.1} parent=0 // pred_region
    _
  $region33: #{tpu_custom_call.1} parent=0 // pred_fallthru
    _
  // Predicated region
  $region34: #{tpu_custom_call.1} parent=0 // pred_check
    _
  $region35: #{tpu_custom_call.1} parent=0 // pred_check_branch
    %383 = sbr.rel (0) target = $region37
  $region36: #{tpu_custom_call.1} parent=0 // pred_region
    _
  $region37: #{tpu_custom_call.1} parent=0 // pred_fallthru
    _

</llo_original>
